<compile_context>
chip_gen: v7x
topology: tpu7x:2x2x1
jax: 0.10.0
libtpu: 0.0.40
codegen_flags: <defaults>
</compile_context>

<pallas_src>
import functools

import jax
import jax.numpy as jnp
from jax.experimental import pallas as pl
from jax.experimental.pallas import tpu as pltpu

LANE = 128
SUBLANE = 8


def _round_up(n, m):
    return ((n + m - 1) // m) * m


def _ffnet_kernel(num_linear, x_ref, *refs):
    """refs = (w0, b0, w1, b1, ..., w_{L-1}, b_{L-1}, out_ref).

    x_ref / w_i are bf16 (MXU-native inputs); biases are f32.  Accumulation,
    bias add and tanh stay in f32; activations are cast back to bf16 only to
    feed the next MXU pass.
    """
    out_ref = refs[-1]
    param_refs = refs[:-1]

    h = x_ref[...]                                       # bf16 (tile, in_pad)
    for i in range(num_linear):
        w = param_refs[2 * i][...]                       # bf16 (in_pad_i, out_pad_i)
        b = param_refs[2 * i + 1][...]                   # f32  (1, out_pad_i)
        acc = jnp.dot(h, w, preferred_element_type=jnp.float32) + b
        if i < num_linear - 1:
            h = jnp.tanh(acc).astype(jnp.bfloat16)       # bf16 for next MXU pass
        else:
            out_ref[...] = acc.astype(out_ref.dtype)     # lane-dense f32 store


def ffnet_forward(x, weights, biases, *, batch_tile=None):
    """Fused FFNet forward.

    x:          (B, in_size) float32
    weights[i]: (in_i, out_i) float32   (already transposed from PyTorch (out,in))
    biases[i]:  (1, out_i)   float32
    Returns (B, out_size) float32.
    """
    B, in_size = x.shape
    num_linear = len(weights)
    out_size = weights[-1].shape[1]

    # --- batch tile: big (up to 512 rows, multiple of 8) to amortize per-step
    #     overhead; pad the batch to a tile multiple (ragged batches OK).
    if batch_tile is None:
        batch_tile = min(512, _round_up(B, SUBLANE))
    batch_tile = max(SUBLANE, _round_up(batch_tile, SUBLANE))
    B_pad = _round_up(B, batch_tile)
    grid = B_pad // batch_tile

    # --- pad every feature dim to a 128-lane multiple (exact: zero padding).
    in_pad = _round_up(in_size, LANE)
    dims = [in_pad]
    params = []
    for w, b in zip(weights, biases):
        isz, osz = w.shape
        isz_pad = dims[-1]
        osz_pad = _round_up(osz, LANE)
        w_p = jnp.zeros((isz_pad, osz_pad), jnp.bfloat16)
        w_p = w_p.at[:isz, :osz].set(w.astype(jnp.bfloat16))
        b_p = jnp.zeros((1, osz_pad), jnp.float32)
        b_p = b_p.at[:, :osz].set(jnp.reshape(b, (1, -1)).astype(jnp.float32))
        params += [w_p, b_p]
        dims.append(osz_pad)
    out_pad = dims[-1]

    x_p = jnp.zeros((B_pad, in_pad), jnp.bfloat16)
    x_p = x_p.at[:B, :in_size].set(x.astype(jnp.bfloat16))

    in_specs = [pl.BlockSpec((batch_tile, in_pad), lambda i: (i, 0))]
    for p in params:
        # Constant block index across the grid -> parameters are DMA'd once.
        in_specs.append(pl.BlockSpec(p.shape, lambda i: (0, 0)))
    out_spec = pl.BlockSpec((batch_tile, out_pad), lambda i: (i, 0))

    # --- advisory cost estimate + VMEM budget (kept well under v7x's 64 MiB).
    flops = int(2 * B_pad * sum(a * b for a, b in zip(dims[:-1], dims[1:])))
    transcendentals = int(B_pad * sum(dims[1:-1]))
    param_bytes = sum(int(p.size) * p.dtype.itemsize for p in params)
    bytes_accessed = int(x_p.size) * 2 + param_bytes + B_pad * out_pad * 4
    tile_bytes = 2 * batch_tile * in_pad * 2 + 2 * batch_tile * out_pad * 4
    act_bytes = 4 * batch_tile * max(dims) * 4
    vmem_limit = int(min(48 << 20,
                         max(32 << 20,
                             2 * (param_bytes + tile_bytes + act_bytes))))

    kernel = functools.partial(_ffnet_kernel, num_linear)

    out_padded = pl.pallas_call(
        kernel,
        out_shape=jax.ShapeDtypeStruct((B_pad, out_pad), jnp.float32),
        grid_spec=pltpu.PrefetchScalarGridSpec(
            num_scalar_prefetch=0,
            grid=(grid,),
            in_specs=in_specs,
            out_specs=out_spec,
        ),
        compiler_params=pltpu.CompilerParams(
            dimension_semantics=("parallel",),
            vmem_limit_bytes=vmem_limit,
        ),
        cost_estimate=pl.CostEstimate(
            flops=flops,
            transcendentals=transcendentals,
            bytes_accessed=int(bytes_accessed),
        ),
    )(x_p, *params)

    return out_padded[:B, :out_size]


def init_ffnet_params(key, in_size, out_size, hidden_size):
    """Xavier-uniform-ish init.  Weights already transposed to (in, out),
    biases as (1, out), both float32 (cast to bf16 inside ffnet_forward)."""
    sizes = [in_size] + list(hidden_size) + [out_size]
    weights, biases = [], []
    for isz, osz in zip(sizes[:-1], sizes[1:]):
        key, kw, kb = jax.random.split(key, 3)
        limit = (6.0 / (isz + osz)) ** 0.5
        w = jax.random.uniform(kw, (isz, osz), jnp.float32, -limit, limit)
        b = jax.random.uniform(kb, (1, osz), jnp.float32, -0.01, 0.01)
        weights.append(w)
        biases.append(b)
    return weights, biases


def ffnet_reference(x, weights, biases):
    """Pure-JAX reference matching the kernel's numerics:
    bf16 matmul inputs, f32 accumulation, f32 bias add + tanh."""
    h = x.astype(jnp.bfloat16)
    n = len(weights)
    out = None
    for i, (w, b) in enumerate(zip(weights, biases)):
        acc = jnp.dot(h, w.astype(jnp.bfloat16),
                      preferred_element_type=jnp.float32) + b.astype(jnp.float32)
        if i < n - 1:
            h = jnp.tanh(acc).astype(jnp.bfloat16)
        else:
            out = acc
    return out


if __name__ == "__main__":
    # Small shapes consistent with FFNet(in_size, out_size, hidden_size).
    in_size, out_size = 16, 8
    hidden_size = [32, 32]
    B = 48  # not a tile multiple on purpose: exercises batch padding

    key = jax.random.PRNGKey(0)
    key, kx = jax.random.split(key)
    x = jax.random.normal(kx, (B, in_size), jnp.float32)

    weights, biases = init_ffnet_params(key, in_size, out_size, hidden_size)

    # batch_tile=32 -> padded batch 64, grid of 2 steps (exercises the pipeline).
    out = ffnet_forward(x, weights, biases, batch_tile=32)
    out = jax.block_until_ready(out)

    ref = ffnet_reference(x, weights, biases)
    assert out.shape == (B, out_size)
    assert jnp.allclose(out, ref, atol=5e-3, rtol=5e-3), "mismatch vs JAX reference"

    print("KERNEL_OK")
</pallas_src>

<mosaic_0001>
module attributes {stable_mosaic.version = 11 : i64} {
  func.func @_ffnet_kernel(%arg0: i32, %arg1: memref<32x128xbf16, #tpu.memory_space<vmem>>, %arg2: memref<128x128xbf16, #tpu.memory_space<vmem>>, %arg3: memref<1x128xf32, #tpu.memory_space<vmem>>, %arg4: memref<128x128xbf16, #tpu.memory_space<vmem>>, %arg5: memref<1x128xf32, #tpu.memory_space<vmem>>, %arg6: memref<128x128xbf16, #tpu.memory_space<vmem>>, %arg7: memref<1x128xf32, #tpu.memory_space<vmem>>, %arg8: memref<32x128xf32, #tpu.memory_space<vmem>>) attributes {dimension_semantics = [#tpu.dimension_semantics<parallel>], iteration_bounds = array<i64: 2>, scalar_prefetch = 0 : i64, scratch_operands = 0 : i64, tpu.core_type = #tpu.core_type<tc>, window_params = [{transform_indices = @transform_0, window_bounds = array<i64: 32, 128>}, {pipeline_mode = #tpu.pipeline_mode<synchronous>, transform_indices = @transform_1, window_bounds = array<i64: 128, 128>}, {pipeline_mode = #tpu.pipeline_mode<synchronous>, transform_indices = @transform_2, window_bounds = array<i64: 1, 128>}, {pipeline_mode = #tpu.pipeline_mode<synchronous>, transform_indices = @transform_3, window_bounds = array<i64: 128, 128>}, {pipeline_mode = #tpu.pipeline_mode<synchronous>, transform_indices = @transform_4, window_bounds = array<i64: 1, 128>}, {pipeline_mode = #tpu.pipeline_mode<synchronous>, transform_indices = @transform_5, window_bounds = array<i64: 128, 128>}, {pipeline_mode = #tpu.pipeline_mode<synchronous>, transform_indices = @transform_6, window_bounds = array<i64: 1, 128>}, {transform_indices = @transform_7, window_bounds = array<i64: 32, 128>}]} {
    %c0 = arith.constant 0 : index
    %c0_0 = arith.constant 0 : index
    %0 = vector.load %arg1[%c0, %c0_0] : memref<32x128xbf16, #tpu.memory_space<vmem>>, vector<32x128xbf16>
    %c0_1 = arith.constant 0 : index
    %c0_2 = arith.constant 0 : index
    %1 = vector.load %arg2[%c0_1, %c0_2] : memref<128x128xbf16, #tpu.memory_space<vmem>>, vector<128x128xbf16>
    %c0_3 = arith.constant 0 : index
    %c0_4 = arith.constant 0 : index
    %2 = vector.load %arg3[%c0_3, %c0_4] : memref<1x128xf32, #tpu.memory_space<vmem>>, vector<1x128xf32>
    %cst = arith.constant dense<0.000000e+00> : vector<32x128xf32>
    %3 = tpu.matmul %0, %1, %cst {dimension_numbers = #tpu.dot_dimension_numbers<[1], [0], [0], [1], [0, 0, 1, 1], [], []>} : vector<32x128xbf16>, vector<128x128xbf16>, vector<32x128xf32> -> vector<32x128xf32>
    %4 = vector.broadcast %2 : vector<1x128xf32> to vector<32x128xf32>
    %5 = arith.addf %3, %4 : vector<32x128xf32>
    %6 = math.tanh %5 : vector<32x128xf32>
    %7 = arith.truncf %6 : vector<32x128xf32> to vector<32x128xbf16>
    %c0_5 = arith.constant 0 : index
    %c0_6 = arith.constant 0 : index
    %8 = vector.load %arg4[%c0_5, %c0_6] : memref<128x128xbf16, #tpu.memory_space<vmem>>, vector<128x128xbf16>
    %c0_7 = arith.constant 0 : index
    %c0_8 = arith.constant 0 : index
    %9 = vector.load %arg5[%c0_7, %c0_8] : memref<1x128xf32, #tpu.memory_space<vmem>>, vector<1x128xf32>
    %cst_9 = arith.constant dense<0.000000e+00> : vector<32x128xf32>
    %10 = tpu.matmul %7, %8, %cst_9 {dimension_numbers = #tpu.dot_dimension_numbers<[1], [0], [0], [1], [0, 0, 1, 1], [], []>} : vector<32x128xbf16>, vector<128x128xbf16>, vector<32x128xf32> -> vector<32x128xf32>
    %11 = vector.broadcast %9 : vector<1x128xf32> to vector<32x128xf32>
    %12 = arith.addf %10, %11 : vector<32x128xf32>
    %13 = math.tanh %12 : vector<32x128xf32>
    %14 = arith.truncf %13 : vector<32x128xf32> to vector<32x128xbf16>
    %c0_10 = arith.constant 0 : index
    %c0_11 = arith.constant 0 : index
    %15 = vector.load %arg6[%c0_10, %c0_11] : memref<128x128xbf16, #tpu.memory_space<vmem>>, vector<128x128xbf16>
    %c0_12 = arith.constant 0 : index
    %c0_13 = arith.constant 0 : index
    %16 = vector.load %arg7[%c0_12, %c0_13] : memref<1x128xf32, #tpu.memory_space<vmem>>, vector<1x128xf32>
    %cst_14 = arith.constant dense<0.000000e+00> : vector<32x128xf32>
    %17 = tpu.matmul %14, %15, %cst_14 {dimension_numbers = #tpu.dot_dimension_numbers<[1], [0], [0], [1], [0, 0, 1, 1], [], []>} : vector<32x128xbf16>, vector<128x128xbf16>, vector<32x128xf32> -> vector<32x128xf32>
    %18 = vector.broadcast %16 : vector<1x128xf32> to vector<32x128xf32>
    %19 = arith.addf %17, %18 : vector<32x128xf32>
    %c0_15 = arith.constant 0 : index
    %c0_16 = arith.constant 0 : index
    %20 = vector.load %arg8[%c0_15, %c0_16] : memref<32x128xf32, #tpu.memory_space<vmem>>, vector<32x128xf32>
    tpu.vector_store %arg8[%c0_15, %c0_16], %19 {strides = array<i32>} : memref<32x128xf32, #tpu.memory_space<vmem>>, vector<32x128xf32>,
    return
  }
  func.func @transform_0(%arg0: i32) -> (i32, i32) {
    %c0_i32 = arith.constant 0 : i32
    %c0_i32_0 = arith.constant 0 : i32
    return %arg0, %c0_i32 : i32, i32
  }
  func.func @transform_1(%arg0: i32) -> (i32, i32) {
    %c0_i32 = arith.constant 0 : i32
    %c0_i32_0 = arith.constant 0 : i32
    %c0_i32_1 = arith.constant 0 : i32
    return %c0_i32, %c0_i32_0 : i32, i32
  }
  func.func @transform_2(%arg0: i32) -> (i32, i32) {
    %c0_i32 = arith.constant 0 : i32
    %c0_i32_0 = arith.constant 0 : i32
    %c0_i32_1 = arith.constant 0 : i32
    return %c0_i32, %c0_i32_0 : i32, i32
  }
  func.func @transform_3(%arg0: i32) -> (i32, i32) {
    %c0_i32 = arith.constant 0 : i32
    %c0_i32_0 = arith.constant 0 : i32
    %c0_i32_1 = arith.constant 0 : i32
    return %c0_i32, %c0_i32_0 : i32, i32
  }
  func.func @transform_4(%arg0: i32) -> (i32, i32) {
    %c0_i32 = arith.constant 0 : i32
    %c0_i32_0 = arith.constant 0 : i32
    %c0_i32_1 = arith.constant 0 : i32
    return %c0_i32, %c0_i32_0 : i32, i32
  }
  func.func @transform_5(%arg0: i32) -> (i32, i32) {
    %c0_i32 = arith.constant 0 : i32
    %c0_i32_0 = arith.constant 0 : i32
    %c0_i32_1 = arith.constant 0 : i32
    return %c0_i32, %c0_i32_0 : i32, i32
  }
  func.func @transform_6(%arg0: i32) -> (i32, i32) {
    %c0_i32 = arith.constant 0 : i32
    %c0_i32_0 = arith.constant 0 : i32
    %c0_i32_1 = arith.constant 0 : i32
    return %c0_i32, %c0_i32_0 : i32, i32
  }
  func.func @transform_7(%arg0: i32) -> (i32, i32) {
    %c0_i32 = arith.constant 0 : i32
    %c0_i32_0 = arith.constant 0 : i32
    return %arg0, %c0_i32 : i32, i32
  }
}

</mosaic_0001>

<llo_original>
// kernel: tpu_custom_call.1
$region0: #{tpu_custom_call.1}
  #allocation0 [shape = 'u32[]', space=smem, size = 0x4, offset = 0x4, fixed_abs, tag = 'smem constant byte address 0x4 - core index']
  #allocation1 [shape = 'u32[144,128]{1,0:T(1,128)}', space=vmem, size = 0x12000, scoped, tag = 'internal scratch']
  %s0 = inlined_call_operand.hbm [shape: bf16[64,128], index: 0, kind: input, shape index: {}]
  %s1 = inlined_call_operand.hbm [shape: bf16[128,128], index: 1, kind: input, shape index: {}]
  %s2 = inlined_call_operand.vmem [shape: f32[1,128], index: 2, kind: input, shape index: {}]
  %s3 = inlined_call_operand.hbm [shape: bf16[128,128], index: 3, kind: input, shape index: {}]
  %s4 = inlined_call_operand.vmem [shape: f32[1,128], index: 4, kind: input, shape index: {}]
  %s5 = inlined_call_operand.hbm [shape: bf16[128,128], index: 5, kind: input, shape index: {}]
  %s6 = inlined_call_operand.vmem [shape: f32[1,128], index: 6, kind: input, shape index: {}]
  %s7 = inlined_call_operand.hbm [shape: f32[64,128], index: 7, kind: output, shape index: {}]
  %s8 = sld [smem:[#allocation0]]
  $region77: #{tpu_custom_call.1} parent=0
    _
  %s10 = ssub.s32 1, %s8
  %s11 = scalar_select 0, %s10, %s8
  $region1: #{tpu_custom_call.1} parent=0
    #allocation2 [shape = 'u8[16384]{0}', space=vmem, size = 0x4000, scoped, tag = 'input window, operand 0']
    #allocation3 [shape = 's32[2]{0}', space=sflag, size = 0x8, scoped, tag = 'scoped memory for tpu_custom_call.1']
    #allocation4 [shape = 's32[2]{0}', space=sflag, size = 0x8, scoped, tag = 'scoped memory for tpu_custom_call.1']
    #allocation5 [shape = 'u8[32768]{0}', space=vmem, size = 0x8000, scoped, tag = 'input window, operand 1, single buffered']
    #allocation6 [shape = 's32[1]{0}', space=sflag, size = 0x4, scoped, tag = 'scoped memory for tpu_custom_call.1']
    #allocation7 [shape = 'u8[32768]{0}', space=vmem, size = 0x8000, scoped, tag = 'input window, operand 3, single buffered']
    #allocation8 [shape = 'u8[32768]{0}', space=vmem, size = 0x8000, scoped, tag = 'input window, operand 5, single buffered']
    #allocation9 [shape = 's32[1]{0}', space=sflag, size = 0x4, scoped, tag = 'scoped memory for tpu_custom_call.1']
    #allocation10 [shape = 'u8[32768]{0}', space=vmem, size = 0x8000, scoped, tag = 'output window, operand 0']
    %12 = vsyncpa [#allocation3], 0
    %s13 = scalar_lea.sflag [#allocation3], 1
    %14 = vsyncpa %s13, 0
    %15 = vsyncpa [#allocation6], 0
    %16 = vsyncpa [#allocation9], 0
    %17 = vsyncpa [#allocation4], 0
    %s18 = scalar_lea.sflag [#allocation4], 1
    %19 = vsyncpa %s18, 0
    loop: start=0, step=1, limit=4
    $region2: #{tpu_custom_call.1} parent=1 // loop_pre_header
      _
    $region3: #{tpu_custom_call.1} parent=1 // loop_header
      %s21 = sphi 0, %s25
      %p22 = scmp.ge.s32.totalorder %s21, 4
      %s31 = sphi 0, %s33
      %s34 = sphi 0, %s31
      %s35 = sphi 0, %s34
      %s51 = sphi 0, %s35
      %s55 = sphi 0, %s55
      %s57 = sphi 0, %s55
      %s58 = sphi 0, %s57
      %s72 = sphi 0, %s58
      %s76 = sphi 0, %s76
      %s78 = sphi 0, %s76
      %s79 = sphi 0, %s78
      %s93 = sphi 0, %s79
      %s97 = sphi 0, %s97
      %s99 = sphi 0, %s97
      %s100 = sphi 0, %s99
      %s114 = sphi 0, %s100
      %s118 = sphi 0, %s118
      %s120 = sphi 0, %s118
      %s121 = sphi 0, %s120
      %s135 = sphi 0, %s121
      %s139 = sphi 0, %s139
      %s141 = sphi 0, %s139
      %s142 = sphi 0, %s141
      %s156 = sphi 0, %s142
      %s160 = sphi 0, %s160
      %s162 = sphi 0, %s160
      %s163 = sphi 0, %s162
      %s177 = sphi 0, %s163
      %s183 = sphi 0, %s185
      %s186 = sphi 0, %s183
      %s187 = sphi 0, %s186
      %s203 = sphi 0, %s187
    $region4: #{tpu_custom_call.1} parent=1 // loop_header_branch
      %24 = sbr.rel (%p22) target = $region8
    $region5: #{tpu_custom_call.1} parent=1 // loop_body
      %s26 = ssub.s32 %s21, 1
      %s27 = ssub.s32 %s21, 2
      %s28 = sadd.s32 %s21, 1
      %s29 = ssub.s32 %s21, %s28
      %p30 = scmp.eq.s32.totalorder %s29, 0
      %s32 = sadd.s32 %s31, 1
      %s33 = scalar_select %p30, %s31, %s32
      %p36 = pneg %p30
      %p37 = scmp.eq.s32.totalorder %s21, 1
      %p38 = por %p36, %p37
      %p39 = scmp.ne.s32.totalorder %s31, %s34
      %p40 = scmp.eq.s32.totalorder %s21, 0
      %p41 = por %p39, %p40
      %p42 = scmp.ne.s32.totalorder %s31, %s34
      %p43 = scmp.eq.s32.totalorder %s26, 1
      %p44 = por %p42, %p43
      %p45 = scmp.ne.s32.totalorder %s34, %s35
      %p46 = scmp.eq.s32.totalorder %s26, 0
      %p47 = por %p45, %p46
      %p48 = scmp.ne.s32.totalorder %s34, %s35
      %p49 = scmp.eq.s32.totalorder %s27, 1
      %p50 = por %p48, %p49
      %p52 = scmp.ne.s32.totalorder %s35, %s51
      %p53 = scmp.eq.s32.totalorder %s27, 0
      %p54 = por %p52, %p53
      %s56 = sadd.s32 %s55, 1
      %p59 = scmp.eq.s32.totalorder %s21, 1
      %p60 = scmp.ne.s32.totalorder %s55, %s57
      %p61 = scmp.eq.s32.totalorder %s21, 0
      %p62 = por %p60, %p61
      %p63 = scmp.ne.s32.totalorder %s55, %s57
      %p64 = scmp.eq.s32.totalorder %s26, 1
      %p65 = por %p63, %p64
      %p66 = scmp.ne.s32.totalorder %s57, %s58
      %p67 = scmp.eq.s32.totalorder %s26, 0
      %p68 = por %p66, %p67
      %p69 = scmp.ne.s32.totalorder %s57, %s58
      %p70 = scmp.eq.s32.totalorder %s27, 1
      %p71 = por %p69, %p70
      %p73 = scmp.ne.s32.totalorder %s58, %s72
      %p74 = scmp.eq.s32.totalorder %s27, 0
      %p75 = por %p73, %p74
      %s77 = sadd.s32 %s76, 1
      %p80 = scmp.eq.s32.totalorder %s21, 1
      %p81 = scmp.ne.s32.totalorder %s76, %s78
      %p82 = scmp.eq.s32.totalorder %s21, 0
      %p83 = por %p81, %p82
      %p84 = scmp.ne.s32.totalorder %s76, %s78
      %p85 = scmp.eq.s32.totalorder %s26, 1
      %p86 = por %p84, %p85
      %p87 = scmp.ne.s32.totalorder %s78, %s79
      %p88 = scmp.eq.s32.totalorder %s26, 0
      %p89 = por %p87, %p88
      %p90 = scmp.ne.s32.totalorder %s78, %s79
      %p91 = scmp.eq.s32.totalorder %s27, 1
      %p92 = por %p90, %p91
      %p94 = scmp.ne.s32.totalorder %s79, %s93
      %p95 = scmp.eq.s32.totalorder %s27, 0
      %p96 = por %p94, %p95
      %s98 = sadd.s32 %s97, 1
      %p101 = scmp.eq.s32.totalorder %s21, 1
      %p102 = scmp.ne.s32.totalorder %s97, %s99
      %p103 = scmp.eq.s32.totalorder %s21, 0
      %p104 = por %p102, %p103
      %p105 = scmp.ne.s32.totalorder %s97, %s99
      %p106 = scmp.eq.s32.totalorder %s26, 1
      %p107 = por %p105, %p106
      %p108 = scmp.ne.s32.totalorder %s99, %s100
      %p109 = scmp.eq.s32.totalorder %s26, 0
      %p110 = por %p108, %p109
      %p111 = scmp.ne.s32.totalorder %s99, %s100
      %p112 = scmp.eq.s32.totalorder %s27, 1
      %p113 = por %p111, %p112
      %p115 = scmp.ne.s32.totalorder %s100, %s114
      %p116 = scmp.eq.s32.totalorder %s27, 0
      %p117 = por %p115, %p116
      %s119 = sadd.s32 %s118, 1
      %p122 = scmp.eq.s32.totalorder %s21, 1
      %p123 = scmp.ne.s32.totalorder %s118, %s120
      %p124 = scmp.eq.s32.totalorder %s21, 0
      %p125 = por %p123, %p124
      %p126 = scmp.ne.s32.totalorder %s118, %s120
      %p127 = scmp.eq.s32.totalorder %s26, 1
      %p128 = por %p126, %p127
      %p129 = scmp.ne.s32.totalorder %s120, %s121
      %p130 = scmp.eq.s32.totalorder %s26, 0
      %p131 = por %p129, %p130
      %p132 = scmp.ne.s32.totalorder %s120, %s121
      %p133 = scmp.eq.s32.totalorder %s27, 1
      %p134 = por %p132, %p133
      %p136 = scmp.ne.s32.totalorder %s121, %s135
      %p137 = scmp.eq.s32.totalorder %s27, 0
      %p138 = por %p136, %p137
      %s140 = sadd.s32 %s139, 1
      %p143 = scmp.eq.s32.totalorder %s21, 1
      %p144 = scmp.ne.s32.totalorder %s139, %s141
      %p145 = scmp.eq.s32.totalorder %s21, 0
      %p146 = por %p144, %p145
      %p147 = scmp.ne.s32.totalorder %s139, %s141
      %p148 = scmp.eq.s32.totalorder %s26, 1
      %p149 = por %p147, %p148
      %p150 = scmp.ne.s32.totalorder %s141, %s142
      %p151 = scmp.eq.s32.totalorder %s26, 0
      %p152 = por %p150, %p151
      %p153 = scmp.ne.s32.totalorder %s141, %s142
      %p154 = scmp.eq.s32.totalorder %s27, 1
      %p155 = por %p153, %p154
      %p157 = scmp.ne.s32.totalorder %s142, %s156
      %p158 = scmp.eq.s32.totalorder %s27, 0
      %p159 = por %p157, %p158
      %s161 = sadd.s32 %s160, 1
      %p164 = scmp.eq.s32.totalorder %s21, 1
      %p165 = scmp.ne.s32.totalorder %s160, %s162
      %p166 = scmp.eq.s32.totalorder %s21, 0
      %p167 = por %p165, %p166
      %p168 = scmp.ne.s32.totalorder %s160, %s162
      %p169 = scmp.eq.s32.totalorder %s26, 1
      %p170 = por %p168, %p169
      %p171 = scmp.ne.s32.totalorder %s162, %s163
      %p172 = scmp.eq.s32.totalorder %s26, 0
      %p173 = por %p171, %p172
      %p174 = scmp.ne.s32.totalorder %s162, %s163
      %p175 = scmp.eq.s32.totalorder %s27, 1
      %p176 = por %p174, %p175
      %p178 = scmp.ne.s32.totalorder %s163, %s177
      %p179 = scmp.eq.s32.totalorder %s27, 0
      %p180 = por %p178, %p179
      %s181 = ssub.s32 %s21, %s28
      %p182 = scmp.eq.s32.totalorder %s181, 0
      %s184 = sadd.s32 %s183, 1
      %s185 = scalar_select %p182, %s183, %s184
      %p188 = pneg %p182
      %p189 = scmp.eq.s32.totalorder %s21, 1
      %p190 = por %p188, %p189
      %p191 = scmp.ne.s32.totalorder %s183, %s186
      %p192 = scmp.eq.s32.totalorder %s21, 0
      %p193 = por %p191, %p192
      %p194 = scmp.ne.s32.totalorder %s183, %s186
      %p195 = scmp.eq.s32.totalorder %s26, 1
      %p196 = por %p194, %p195
      %p197 = scmp.ne.s32.totalorder %s186, %s187
      %p198 = scmp.eq.s32.totalorder %s26, 0
      %p199 = por %p197, %p198
      %p200 = scmp.ne.s32.totalorder %s186, %s187
      %p201 = scmp.eq.s32.totalorder %s27, 1
      %p202 = por %p200, %p201
      %p204 = scmp.ne.s32.totalorder %s187, %s203
      %p205 = scmp.eq.s32.totalorder %s27, 0
      %p206 = por %p204, %p205
      %p207 = scmp.le.s32.totalorder 1, %s21
      %p208 = scmp.lt.s32.totalorder %s21, 3
      %p209 = pnand %p207, %p208
      %p210 = pneg %p209
      // Predicated region
      $region9: #{tpu_custom_call.1} parent=5 // pred_check
        _
      $region10: #{tpu_custom_call.1} parent=5 // pred_check_branch
        %212 = sbr.rel (%p209) target = $region12
      $region11: #{tpu_custom_call.1} parent=5 // pred_region
        %s213 = ssub.s32 %s21, 1
        // Predicated region
        $region13: #{tpu_custom_call.1} parent=11 // pred_check
          %p214 = pneg %p68
        $region14: #{tpu_custom_call.1} parent=11 // pred_check_branch
          %216 = sbr.rel (%p214) target = $region16
        $region15: #{tpu_custom_call.1} parent=11 // pred_region
          %s218 = ssub.s32 1024, 1024
          %219 = vsyncadd [#allocation6], %s218
          %s220 = sshll.u32 [#allocation5], 4
          %s221 = int_to_ptr.vmem [resolvable:$true] %s220
          %226 = dma.hbm_to_vmem [thread:$0]  %s1, 1024, %s221, [#allocation6], 64, 64, 4
        $region16: #{tpu_custom_call.1} parent=11 // pred_fallthru
          _
        // Predicated region
        $region17: #{tpu_custom_call.1} parent=11 // pred_check
          %p227 = pneg %p89
        $region18: #{tpu_custom_call.1} parent=11 // pred_check_branch
          %229 = sbr.rel (%p227) target = $region20
        $region19: #{tpu_custom_call.1} parent=11 // pred_region
          _
        $region20: #{tpu_custom_call.1} parent=11 // pred_fallthru
          _
        // Predicated region
        $region21: #{tpu_custom_call.1} parent=11 // pred_check
          %p230 = pneg %p110
        $region22: #{tpu_custom_call.1} parent=11 // pred_check_branch
          %232 = sbr.rel (%p230) target = $region24
        $region23: #{tpu_custom_call.1} parent=11 // pred_region
          %s234 = ssub.s32 1024, 1024
          %235 = vsyncadd [#allocation6], %s234
          %s236 = sshll.u32 [#allocation7], 4
          %s237 = int_to_ptr.vmem [resolvable:$true] %s236
          %242 = dma.hbm_to_vmem [thread:$0]  %s3, 1024, %s237, [#allocation6], 64, 64, 4
        $region24: #{tpu_custom_call.1} parent=11 // pred_fallthru
          _
        // Predicated region
        $region25: #{tpu_custom_call.1} parent=11 // pred_check
          %p243 = pneg %p131
        $region26: #{tpu_custom_call.1} parent=11 // pred_check_branch
          %245 = sbr.rel (%p243) target = $region28
        $region27: #{tpu_custom_call.1} parent=11 // pred_region
          _
        $region28: #{tpu_custom_call.1} parent=11 // pred_fallthru
          _
        // Predicated region
        $region29: #{tpu_custom_call.1} parent=11 // pred_check
          %p246 = pneg %p152
        $region30: #{tpu_custom_call.1} parent=11 // pred_check_branch
          %248 = sbr.rel (%p246) target = $region32
        $region31: #{tpu_custom_call.1} parent=11 // pred_region
          %s250 = ssub.s32 1024, 1024
          %251 = vsyncadd [#allocation9], %s250
          %s252 = sshll.u32 [#allocation8], 4
          %s253 = int_to_ptr.vmem [resolvable:$true] %s252
          %258 = dma.hbm_to_vmem [thread:$0]  %s5, 1024, %s253, [#allocation9], 64, 64, 4
        $region32: #{tpu_custom_call.1} parent=11 // pred_fallthru
          _
        // Predicated region
        $region33: #{tpu_custom_call.1} parent=11 // pred_check
          %p259 = pneg %p173
        $region34: #{tpu_custom_call.1} parent=11 // pred_check_branch
          %261 = sbr.rel (%p259) target = $region36
        $region35: #{tpu_custom_call.1} parent=11 // pred_region
          _
        $region36: #{tpu_custom_call.1} parent=11 // pred_fallthru
          _
      $region12: #{tpu_custom_call.1} parent=5 // pred_fallthru
        _
      %p262 = scmp.lt.s32.totalorder %s21, 2
      // Predicated region
      $region37: #{tpu_custom_call.1} parent=5 // pred_check
        %p263 = pneg %p262
      $region38: #{tpu_custom_call.1} parent=5 // pred_check_branch
        %265 = sbr.rel (%p263) target = $region40
      $region39: #{tpu_custom_call.1} parent=5 // pred_region
        // Predicated region
        $region41: #{tpu_custom_call.1} parent=39 // pred_check
          %p266 = pneg %p41
        $region42: #{tpu_custom_call.1} parent=39 // pred_check_branch
          %268 = sbr.rel (%p266) target = $region44
        $region43: #{tpu_custom_call.1} parent=39 // pred_region
          %s269 = sand.u32 %s31, 1
          %s270 = scalar_lea.sflag [#allocation3], %s269
          %s271 = sand.u32 %s31, 1
          %s272 = smul.addr %s271, 16
          %s273 = scalar_lea.vmem [#allocation2], %s272
          %s274 = smul.u32 4, %s21
          %s276 = ssub.s32 256, 256
          %277 = vsyncadd %s270, %s276
          %s278 = smul.addr %s274, 64
          %s279 = scalar_lea.hbm %s0, %s278
          %s280 = sshll.u32 %s273, 4
          %s281 = int_to_ptr.vmem [resolvable:$true] %s280
          %286 = dma.hbm_to_vmem [thread:$0]  %s279, 256, %s281, %s270, 64, 64, 4
        $region44: #{tpu_custom_call.1} parent=39 // pred_fallthru
          _
      $region40: #{tpu_custom_call.1} parent=5 // pred_fallthru
        _
      %p287 = scmp.le.s32.totalorder 1, %s21
      %p288 = scmp.lt.s32.totalorder %s21, 3
      %p289 = pnand %p287, %p288
      %p290 = pneg %p289
      // Predicated region
      $region45: #{tpu_custom_call.1} parent=5 // pred_check
        _
      $region46: #{tpu_custom_call.1} parent=5 // pred_check_branch
        %292 = sbr.rel (%p289) target = $region48
      $region47: #{tpu_custom_call.1} parent=5 // pred_region
        %s293 = ssub.s32 %s21, 1
        %s294 = sand.u32 %s34, 1
        %s295 = scalar_lea.sflag [#allocation3], %s294
        %s296 = sand.u32 %s34, 1
        %s297 = smul.addr %s296, 16
        %s298 = scalar_lea.vmem [#allocation2], %s297
        // Predicated region
        $region49: #{tpu_custom_call.1} parent=47 // pred_check
          %p299 = pneg %p47
        $region50: #{tpu_custom_call.1} parent=47 // pred_check_branch
          %301 = sbr.rel (%p299) target = $region52
        $region51: #{tpu_custom_call.1} parent=47 // pred_region
          %302 = dma.done %s295, 256
        $region52: #{tpu_custom_call.1} parent=47 // pred_fallthru
          _
        // Predicated region
        $region53: #{tpu_custom_call.1} parent=47 // pred_check
          %p303 = pneg %p68
        $region54: #{tpu_custom_call.1} parent=47 // pred_check_branch
          %305 = sbr.rel (%p303) target = $region56
        $region55: #{tpu_custom_call.1} parent=47 // pred_region
          %306 = dma.done [#allocation6], 1024
        $region56: #{tpu_custom_call.1} parent=47 // pred_fallthru
          _
        // Predicated region
        $region57: #{tpu_custom_call.1} parent=47 // pred_check
          %p307 = pneg %p110
        $region58: #{tpu_custom_call.1} parent=47 // pred_check_branch
          %309 = sbr.rel (%p307) target = $region60
        $region59: #{tpu_custom_call.1} parent=47 // pred_region
          %310 = dma.done [#allocation6], 1024
        $region60: #{tpu_custom_call.1} parent=47 // pred_fallthru
          _
        // Predicated region
        $region61: #{tpu_custom_call.1} parent=47 // pred_check
          %p311 = pneg %p152
        $region62: #{tpu_custom_call.1} parent=47 // pred_check_branch
          %313 = sbr.rel (%p311) target = $region64
        $region63: #{tpu_custom_call.1} parent=47 // pred_region
          %314 = dma.done [#allocation9], 1024
        $region64: #{tpu_custom_call.1} parent=47 // pred_fallthru
          _
        %s315 = sand.u32 %s34, 1
        %s316 = scalar_lea.sflag [#allocation3], %s315
        %s317 = sand.u32 %s34, 1
        %s318 = smul.addr %s317, 16
        %s319 = scalar_lea.vmem [#allocation2], %s318
        %p320 = pneg %p47
        %p321 = pneg %p44
        %p322 = pneg %p68
        %p323 = pneg %p65
        %p324 = pneg %p89
        %p325 = pneg %p86
        %p326 = pneg %p110
        %p327 = pneg %p107
        %p328 = pneg %p131
        %p329 = pneg %p128
        %p330 = pneg %p152
        %p331 = pneg %p149
        %p332 = pneg %p173
        %p333 = pneg %p170
        %p334 = pneg %p199
        %p335 = pneg %p196
        %s336 = sand.u32 %s186, 1
        %s337 = scalar_lea.sflag [#allocation4], %s336
        %s338 = sand.u32 %s186, 1
        %s339 = smul.addr %s338, 32
        %s340 = scalar_lea.vmem [#allocation10], %s339
        %s341 = smul.u32 4, %s26
        %s342 = smul.u32 4, %s26
        %v344 = vld [vmem:[%s298] sm:$0xf]
        %v345 = vld [vmem:[%s298 + $0x4] sm:$0xf]
        %v346 = vld [vmem:[%s298 + $0x8] sm:$0xf]
        %v347 = vld [vmem:[%s298 + $0xc] sm:$0xf]
        %v348 = vld [vmem:[#allocation5] sm:$0xf]
        %v349 = vld [vmem:[#allocation5 + $0x4] sm:$0xf]
        %v350 = vld [vmem:[#allocation5 + $0x8] sm:$0xf]
        %v351 = vld [vmem:[#allocation5 + $0xc] sm:$0xf]
        %v352 = vld [vmem:[#allocation5 + $0x10] sm:$0xf]
        %v353 = vld [vmem:[#allocation5 + $0x14] sm:$0xf]
        %v354 = vld [vmem:[#allocation5 + $0x18] sm:$0xf]
        %v355 = vld [vmem:[#allocation5 + $0x1c] sm:$0xf]
        %v356 = vld [vmem:[#allocation5 + $0x20] sm:$0xf]
        %v357 = vld [vmem:[#allocation5 + $0x24] sm:$0xf]
        %v358 = vld [vmem:[#allocation5 + $0x28] sm:$0xf]
        %v359 = vld [vmem:[#allocation5 + $0x2c] sm:$0xf]
        %v360 = vld [vmem:[#allocation5 + $0x30] sm:$0xf]
        %v361 = vld [vmem:[#allocation5 + $0x34] sm:$0xf]
        %v362 = vld [vmem:[#allocation5 + $0x38] sm:$0xf]
        %v363 = vld [vmem:[#allocation5 + $0x3c] sm:$0xf]
        %v364 = vld [vmem:[%s2] sm:$0x1]
        %v366 = vlaneseq
        %v367 = vshrl.u32 %v366, 7
        %v368 = vsub.s32 0, %v367
        %v369 = vrot.slane %v364, %v368
        %v375 = vunpack.c.l.b16 %v344
        %v376 = vunpack.c.l.b16 %v345
        %v377 = vunpack.c.l.b16 %v346
        %v378 = vunpack.c.l.b16 %v347
        %v379 = vpack.c.b16 %v376, %v375
        %v380 = vpack.c.b16 %v378, %v377
        %v399 = vunpack.c.l.b16 %v348
        %v400 = vunpack.c.l.b16 %v349
        %v401 = vunpack.c.l.b16 %v350
        %v402 = vunpack.c.l.b16 %v351
        %v403 = vunpack.c.l.b16 %v352
        %v404 = vunpack.c.l.b16 %v353
        %v405 = vunpack.c.l.b16 %v354
        %v406 = vunpack.c.l.b16 %v355
        %v407 = vunpack.c.l.b16 %v356
        %v408 = vunpack.c.l.b16 %v357
        %v409 = vunpack.c.l.b16 %v358
        %v410 = vunpack.c.l.b16 %v359
        %v411 = vunpack.c.l.b16 %v360
        %v412 = vunpack.c.l.b16 %v361
        %v413 = vunpack.c.l.b16 %v362
        %v414 = vunpack.c.l.b16 %v363
        %v415 = vpack.c.b16 %v400, %v399
        %v416 = vpack.c.b16 %v402, %v401
        %v417 = vpack.c.b16 %v404, %v403
        %v418 = vpack.c.b16 %v406, %v405
        %v419 = vpack.c.b16 %v408, %v407
        %v420 = vpack.c.b16 %v410, %v409
        %v421 = vpack.c.b16 %v412, %v411
        %v422 = vpack.c.b16 %v414, %v413
        %431 = vmatprep.subr.bf16.mxu0 0
        %432 = vmatpush1.bf16.msra.mxu0 %v415
        %433 = vmatprep.subr.bf16.mxu0 0
        %434 = vmatpush1.bf16.msra.mxu0 %v416
        %435 = vmatprep.subr.bf16.mxu0 0
        %436 = vmatpush1.bf16.msra.mxu0 %v417
        %437 = vmatprep.subr.bf16.mxu0 0
        %438 = vmatpush1.bf16.msra.mxu0 %v418
        %439 = vmatprep.subr.bf16.mxu0 0
        %440 = vmatpush1.bf16.msra.mxu0 %v419
        %441 = vmatprep.subr.bf16.mxu0 0
        %442 = vmatpush1.bf16.msra.mxu0 %v420
        %443 = vmatprep.subr.bf16.mxu0 0
        %444 = vmatpush1.bf16.msra.mxu0 %v421
        %445 = vmatprep.subr.bf16.mxu0 0
        %446 = vmatpush1.bf16.msra.mxu0 %v422
        %447 = vmatprep.subr.bf16.mxu0 0
        %448 = vmatpush1.bf16.msra.mxu0 0
        %449 = vmatprep.subr.bf16.mxu0 0
        %450 = vmatpush1.bf16.msra.mxu0 0
        %451 = vmatprep.subr.bf16.mxu0 0
        %452 = vmatpush1.bf16.msra.mxu0 0
        %453 = vmatprep.subr.bf16.mxu0 0
        %454 = vmatpush1.bf16.msra.mxu0 0
        %455 = vmatprep.subr.bf16.mxu0 0
        %456 = vmatpush1.bf16.msra.mxu0 0
        %457 = vmatprep.subr.bf16.mxu0 0
        %458 = vmatpush1.bf16.msra.mxu0 0
        %459 = vmatprep.subr.bf16.mxu0 0
        %460 = vmatpush1.bf16.msra.mxu0 0
        %461 = vmatprep.subr.bf16.mxu0 0
        %462 = vmatpush1.bf16.msra.mxu0 0
        %463 = vmatprep.mubr.bf16.mxu0 0
        %464 = vmatmul.mubr.bf16.gmra.mrb[0].mxu0 %v379
        %v465 = vpop.f32.mrb[0].mxu0
        %v466 = vadd.f32 %v369, %v465
        %v467 = vpop.f32.mrb[0].mxu0
        %v468 = vpop.f32.mrb[0].mxu0
        %v469 = vadd.f32 %v369, %v468
        %v470 = vpop.f32.mrb[0].mxu0
        %471 = vmatprep.mubr.bf16.mxu0 0
        %472 = vmatmul.mubr.bf16.gmra.mrb[0].mxu0 %v380
        %v473 = vpop.f32.mrb[0].mxu0
        %v474 = vadd.f32 %v369, %v473
        %v475 = vpop.f32.mrb[0].mxu0
        %v476 = vpop.f32.mrb[0].mxu0
        %v477 = vadd.f32 %v369, %v476
        %v478 = vpop.f32.mrb[0].mxu0
        %479 = vdwg.mxu0
        %v480 = vtanh.pop %v466
        %v481 = vtanh.pop %v469
        %v482 = vtanh.pop %v474
        %v483 = vtanh.pop %v477
        %v484 = vpack.c.bf16 %v481, %v480
        %v485 = vpack.c.bf16 %v483, %v482
        %v486 = vld [vmem:[#allocation7] sm:$0xf]
        %v487 = vld [vmem:[#allocation7 + $0x4] sm:$0xf]
        %v488 = vld [vmem:[#allocation7 + $0x8] sm:$0xf]
        %v489 = vld [vmem:[#allocation7 + $0xc] sm:$0xf]
        %v490 = vld [vmem:[#allocation7 + $0x10] sm:$0xf]
        %v491 = vld [vmem:[#allocation7 + $0x14] sm:$0xf]
        %v492 = vld [vmem:[#allocation7 + $0x18] sm:$0xf]
        %v493 = vld [vmem:[#allocation7 + $0x1c] sm:$0xf]
        %v494 = vld [vmem:[#allocation7 + $0x20] sm:$0xf]
        %v495 = vld [vmem:[#allocation7 + $0x24] sm:$0xf]
        %v496 = vld [vmem:[#allocation7 + $0x28] sm:$0xf]
        %v497 = vld [vmem:[#allocation7 + $0x2c] sm:$0xf]
        %v498 = vld [vmem:[#allocation7 + $0x30] sm:$0xf]
        %v499 = vld [vmem:[#allocation7 + $0x34] sm:$0xf]
        %v500 = vld [vmem:[#allocation7 + $0x38] sm:$0xf]
        %v501 = vld [vmem:[#allocation7 + $0x3c] sm:$0xf]
        %v502 = vld [vmem:[%s4] sm:$0x1]
        %v504 = vlaneseq
        %v505 = vshrl.u32 %v504, 7
        %v506 = vsub.s32 0, %v505
        %v507 = vrot.slane %v502, %v506
        %v525 = vunpack.c.l.b16 %v486
        %v526 = vunpack.c.l.b16 %v487
        %v527 = vunpack.c.l.b16 %v488
        %v528 = vunpack.c.l.b16 %v489
        %v529 = vunpack.c.l.b16 %v490
        %v530 = vunpack.c.l.b16 %v491
        %v531 = vunpack.c.l.b16 %v492
        %v532 = vunpack.c.l.b16 %v493
        %v533 = vunpack.c.l.b16 %v494
        %v534 = vunpack.c.l.b16 %v495
        %v535 = vunpack.c.l.b16 %v496
        %v536 = vunpack.c.l.b16 %v497
        %v537 = vunpack.c.l.b16 %v498
        %v538 = vunpack.c.l.b16 %v499
        %v539 = vunpack.c.l.b16 %v500
        %v540 = vunpack.c.l.b16 %v501
        %v541 = vpack.c.b16 %v526, %v525
        %v542 = vpack.c.b16 %v528, %v527
        %v543 = vpack.c.b16 %v530, %v529
        %v544 = vpack.c.b16 %v532, %v531
        %v545 = vpack.c.b16 %v534, %v533
        %v546 = vpack.c.b16 %v536, %v535
        %v547 = vpack.c.b16 %v538, %v537
        %v548 = vpack.c.b16 %v540, %v539
        %557 = vmatprep.subr.bf16.mxu0 0
        %558 = vmatpush1.bf16.msra.mxu0 %v541
        %559 = vmatprep.subr.bf16.mxu0 0
        %560 = vmatpush1.bf16.msra.mxu0 %v542
        %561 = vmatprep.subr.bf16.mxu0 0
        %562 = vmatpush1.bf16.msra.mxu0 %v543
        %563 = vmatprep.subr.bf16.mxu0 0
        %564 = vmatpush1.bf16.msra.mxu0 %v544
        %565 = vmatprep.subr.bf16.mxu0 0
        %566 = vmatpush1.bf16.msra.mxu0 %v545
        %567 = vmatprep.subr.bf16.mxu0 0
        %568 = vmatpush1.bf16.msra.mxu0 %v546
        %569 = vmatprep.subr.bf16.mxu0 0
        %570 = vmatpush1.bf16.msra.mxu0 %v547
        %571 = vmatprep.subr.bf16.mxu0 0
        %572 = vmatpush1.bf16.msra.mxu0 %v548
        %573 = vmatprep.subr.bf16.mxu0 0
        %574 = vmatpush1.bf16.msra.mxu0 0
        %575 = vmatprep.subr.bf16.mxu0 0
        %576 = vmatpush1.bf16.msra.mxu0 0
        %577 = vmatprep.subr.bf16.mxu0 0
        %578 = vmatpush1.bf16.msra.mxu0 0
        %579 = vmatprep.subr.bf16.mxu0 0
        %580 = vmatpush1.bf16.msra.mxu0 0
        %581 = vmatprep.subr.bf16.mxu0 0
        %582 = vmatpush1.bf16.msra.mxu0 0
        %583 = vmatprep.subr.bf16.mxu0 0
        %584 = vmatpush1.bf16.msra.mxu0 0
        %585 = vmatprep.subr.bf16.mxu0 0
        %586 = vmatpush1.bf16.msra.mxu0 0
        %587 = vmatprep.subr.bf16.mxu0 0
        %588 = vmatpush1.bf16.msra.mxu0 0
        %589 = vmatprep.mubr.bf16.mxu0 0
        %590 = vmatmul.mubr.bf16.gmra.mrb[0].mxu0 %v484
        %v591 = vpop.f32.mrb[0].mxu0
        %v592 = vadd.f32 %v507, %v591
        %v593 = vpop.f32.mrb[0].mxu0
        %v594 = vpop.f32.mrb[0].mxu0
        %v595 = vadd.f32 %v507, %v594
        %v596 = vpop.f32.mrb[0].mxu0
        %597 = vmatprep.mubr.bf16.mxu0 0
        %598 = vmatmul.mubr.bf16.gmra.mrb[0].mxu0 %v485
        %v599 = vpop.f32.mrb[0].mxu0
        %v600 = vadd.f32 %v507, %v599
        %v601 = vpop.f32.mrb[0].mxu0
        %v602 = vpop.f32.mrb[0].mxu0
        %v603 = vadd.f32 %v507, %v602
        %v604 = vpop.f32.mrb[0].mxu0
        %605 = vdwg.mxu0
        %v606 = vtanh.pop %v592
        %v607 = vtanh.pop %v595
        %v608 = vtanh.pop %v600
        %v609 = vtanh.pop %v603
        %v610 = vpack.c.bf16 %v607, %v606
        %v611 = vpack.c.bf16 %v609, %v608
        %v612 = vld [vmem:[#allocation8] sm:$0xf]
        %v613 = vld [vmem:[#allocation8 + $0x4] sm:$0xf]
        %v614 = vld [vmem:[#allocation8 + $0x8] sm:$0xf]
        %v615 = vld [vmem:[#allocation8 + $0xc] sm:$0xf]
        %v616 = vld [vmem:[#allocation8 + $0x10] sm:$0xf]
        %v617 = vld [vmem:[#allocation8 + $0x14] sm:$0xf]
        %v618 = vld [vmem:[#allocation8 + $0x18] sm:$0xf]
        %v619 = vld [vmem:[#allocation8 + $0x1c] sm:$0xf]
        %v620 = vld [vmem:[#allocation8 + $0x20] sm:$0xf]
        %v621 = vld [vmem:[#allocation8 + $0x24] sm:$0xf]
        %v622 = vld [vmem:[#allocation8 + $0x28] sm:$0xf]
        %v623 = vld [vmem:[#allocation8 + $0x2c] sm:$0xf]
        %v624 = vld [vmem:[#allocation8 + $0x30] sm:$0xf]
        %v625 = vld [vmem:[#allocation8 + $0x34] sm:$0xf]
        %v626 = vld [vmem:[#allocation8 + $0x38] sm:$0xf]
        %v627 = vld [vmem:[#allocation8 + $0x3c] sm:$0xf]
        %v628 = vld [vmem:[%s6] sm:$0x1]
        %v630 = vlaneseq
        %v631 = vshrl.u32 %v630, 7
        %v632 = vsub.s32 0, %v631
        %v633 = vrot.slane %v628, %v632
        %v651 = vunpack.c.l.b16 %v612
        %v652 = vunpack.c.l.b16 %v613
        %v653 = vunpack.c.l.b16 %v614
        %v654 = vunpack.c.l.b16 %v615
        %v655 = vunpack.c.l.b16 %v616
        %v656 = vunpack.c.l.b16 %v617
        %v657 = vunpack.c.l.b16 %v618
        %v658 = vunpack.c.l.b16 %v619
        %v659 = vunpack.c.l.b16 %v620
        %v660 = vunpack.c.l.b16 %v621
        %v661 = vunpack.c.l.b16 %v622
        %v662 = vunpack.c.l.b16 %v623
        %v663 = vunpack.c.l.b16 %v624
        %v664 = vunpack.c.l.b16 %v625
        %v665 = vunpack.c.l.b16 %v626
        %v666 = vunpack.c.l.b16 %v627
        %v667 = vpack.c.b16 %v652, %v651
        %v668 = vpack.c.b16 %v654, %v653
        %v669 = vpack.c.b16 %v656, %v655
        %v670 = vpack.c.b16 %v658, %v657
        %v671 = vpack.c.b16 %v660, %v659
        %v672 = vpack.c.b16 %v662, %v661
        %v673 = vpack.c.b16 %v664, %v663
        %v674 = vpack.c.b16 %v666, %v665
        %683 = vmatprep.subr.bf16.mxu0 0
        %684 = vmatpush1.bf16.msra.mxu0 %v667
        %685 = vmatprep.subr.bf16.mxu0 0
        %686 = vmatpush1.bf16.msra.mxu0 %v668
        %687 = vmatprep.subr.bf16.mxu0 0
        %688 = vmatpush1.bf16.msra.mxu0 %v669
        %689 = vmatprep.subr.bf16.mxu0 0
        %690 = vmatpush1.bf16.msra.mxu0 %v670
        %691 = vmatprep.subr.bf16.mxu0 0
        %692 = vmatpush1.bf16.msra.mxu0 %v671
        %693 = vmatprep.subr.bf16.mxu0 0
        %694 = vmatpush1.bf16.msra.mxu0 %v672
        %695 = vmatprep.subr.bf16.mxu0 0
        %696 = vmatpush1.bf16.msra.mxu0 %v673
        %697 = vmatprep.subr.bf16.mxu0 0
        %698 = vmatpush1.bf16.msra.mxu0 %v674
        %699 = vmatprep.subr.bf16.mxu0 0
        %700 = vmatpush1.bf16.msra.mxu0 0
        %701 = vmatprep.subr.bf16.mxu0 0
        %702 = vmatpush1.bf16.msra.mxu0 0
        %703 = vmatprep.subr.bf16.mxu0 0
        %704 = vmatpush1.bf16.msra.mxu0 0
        %705 = vmatprep.subr.bf16.mxu0 0
        %706 = vmatpush1.bf16.msra.mxu0 0
        %707 = vmatprep.subr.bf16.mxu0 0
        %708 = vmatpush1.bf16.msra.mxu0 0
        %709 = vmatprep.subr.bf16.mxu0 0
        %710 = vmatpush1.bf16.msra.mxu0 0
        %711 = vmatprep.subr.bf16.mxu0 0
        %712 = vmatpush1.bf16.msra.mxu0 0
        %713 = vmatprep.subr.bf16.mxu0 0
        %714 = vmatpush1.bf16.msra.mxu0 0
        %715 = vmatprep.mubr.bf16.mxu0 0
        %716 = vmatmul.mubr.bf16.gmra.mrb[0].mxu0 %v610
        %v717 = vpop.f32.mrb[0].mxu0
        %v718 = vadd.f32 %v633, %v717
        %v719 = vpop.f32.mrb[0].mxu0
        %v720 = vpop.f32.mrb[0].mxu0
        %v721 = vadd.f32 %v633, %v720
        %v722 = vpop.f32.mrb[0].mxu0
        %723 = vmatprep.mubr.bf16.mxu0 0
        %724 = vmatmul.mubr.bf16.gmra.mrb[0].mxu0 %v611
        %v725 = vpop.f32.mrb[0].mxu0
        %v726 = vadd.f32 %v633, %v725
        %v727 = vpop.f32.mrb[0].mxu0
        %v728 = vpop.f32.mrb[0].mxu0
        %v729 = vadd.f32 %v633, %v728
        %v730 = vpop.f32.mrb[0].mxu0
        %731 = vdwg.mxu0
        %732 = vst [vmem:[%s340] sm:$0xff] %v718
        %733 = vst [vmem:[%s340 + $0x8] sm:$0xff] %v721
        %734 = vst [vmem:[%s340 + $0x10] sm:$0xff] %v726
        %735 = vst [vmem:[%s340 + $0x18] sm:$0xff] %v729
        %s736 = sand.u32 %s186, 1
        %s737 = scalar_lea.sflag [#allocation4], %s736
        %s738 = sand.u32 %s186, 1
        %s739 = smul.addr %s738, 32
        %s740 = scalar_lea.vmem [#allocation10], %s739
        // Predicated region
        $region65: #{tpu_custom_call.1} parent=47 // pred_check
          %p741 = pneg %p196
        $region66: #{tpu_custom_call.1} parent=47 // pred_check_branch
          %743 = sbr.rel (%p741) target = $region68
        $region67: #{tpu_custom_call.1} parent=47 // pred_region
          %s744 = smul.u32 4, %s26
          %s746 = ssub.s32 512, 512
          %747 = vsyncadd %s737, %s746
          %s748 = smul.addr %s744, 128
          %s749 = scalar_lea.hbm %s7, %s748
          %s750 = sshll.u32 %s740, 4
          %s751 = int_to_ptr.vmem [resolvable:$true] %s750
          %756 = dma.vmem_to_hbm [thread:$0]  %s751, 512, %s749, %s737, 128, 128, 8
        $region68: #{tpu_custom_call.1} parent=47 // pred_fallthru
          _
      $region48: #{tpu_custom_call.1} parent=5 // pred_fallthru
        _
      %p757 = scmp.le.s32.totalorder 2, %s21
      // Predicated region
      $region69: #{tpu_custom_call.1} parent=5 // pred_check
        %p758 = pneg %p757
      $region70: #{tpu_custom_call.1} parent=5 // pred_check_branch
        %760 = sbr.rel (%p758) target = $region72
      $region71: #{tpu_custom_call.1} parent=5 // pred_region
        %s761 = ssub.s32 %s21, 2
        // Predicated region
        $region73: #{tpu_custom_call.1} parent=71 // pred_check
          %p762 = pneg %p202
        $region74: #{tpu_custom_call.1} parent=71 // pred_check_branch
          %764 = sbr.rel (%p762) target = $region76
        $region75: #{tpu_custom_call.1} parent=71 // pred_region
          %s765 = sand.u32 %s187, 1
          %s766 = scalar_lea.sflag [#allocation4], %s765
          %s767 = sand.u32 %s187, 1
          %s768 = smul.addr %s767, 32
          %s769 = scalar_lea.vmem [#allocation10], %s768
          %770 = dma.done %s766, 512
        $region76: #{tpu_custom_call.1} parent=71 // pred_fallthru
          _
      $region72: #{tpu_custom_call.1} parent=5 // pred_fallthru
        _
    $region6: #{tpu_custom_call.1} parent=1 // loop_footer
      %s25 = sadd.s32 1, %s21
    $region7: #{tpu_custom_call.1} parent=1 // loop_footer_branch
      %20 = sbr.rel target = $region3
    $region8: #{tpu_custom_call.1} parent=1 // loop_exit
      _
    %771 = vsyncpa [#allocation3], 1
    %s772 = scalar_lea.sflag [#allocation3], 1
    %773 = vsyncpa %s772, 1
    %774 = vsyncpa [#allocation6], 1
    %775 = vsyncpa [#allocation9], 1
    %776 = vsyncpa [#allocation4], 1
    %s777 = scalar_lea.sflag [#allocation4], 1
    %778 = vsyncpa %s777, 1

</llo_original>
